<compile_context>
chip_gen: v6e
topology: v6e:2x2x1
jax: 0.10.0
libtpu: 0.0.40
codegen_flags: <defaults>
</compile_context>

<pallas_src>
import functools

import jax
import jax.numpy as jnp
from jax.experimental import pallas as pl
from jax.experimental.pallas import tpu as pltpu


def _focal_loss_kernel(logits_ref, targets_ref, out_ref, *, gamma):
    # logits_ref: (TILE_N, C) native dtype in VMEM
    # targets_ref: (TILE_N, 1) int32 in VMEM
    # out_ref:     (TILE_N, 1) float32 in VMEM
    x = logits_ref[...].astype(jnp.float32)               # cast on-tile, not in HBM
    t = targets_ref[...]                                   # (TILE_N, 1) int32
    n, c = x.shape

    # Numerically-stable log-softmax cross-entropy: lse(x) - x[target]
    m = jnp.max(x, axis=1, keepdims=True)                  # (TILE_N, 1)
    lse = m + jnp.log(jnp.sum(jnp.exp(x - m), axis=1, keepdims=True))

    cls_ids = jax.lax.broadcasted_iota(jnp.int32, (n, c), 1)
    x_target = jnp.sum(jnp.where(cls_ids == t, x, 0.0), axis=1, keepdims=True)

    loss = lse - x_target                                   # (TILE_N, 1) per-sample CE

    if gamma == 0.0:
        # torch.pow(x, 0) == 1 -> modulation is identity; skip it (also avoids
        # the 0**0 NaN hazard of pow lowered as exp(g*log(x))).
        focal = loss
    else:
        # p = 1 - exp(-loss); guard small losses with a 2nd-order Taylor term to
        # avoid catastrophic cancellation (same effect as -expm1(-loss)).
        p_exact = 1.0 - jnp.exp(-loss)
        p_taylor = loss * (1.0 - 0.5 * loss)
        p = jnp.where(loss < 1e-3, p_taylor, p_exact)
        p = jnp.maximum(p, 0.0)                             # rounding can make loss ~ -1e-7

        if float(gamma).is_integer() and 0.0 < gamma <= 8.0:
            # Integer gamma (the common gamma=2): repeated VPU multiply, no EUP pow.
            factor = p
            for _ in range(int(gamma) - 1):
                factor = factor * p
        else:
            factor = jnp.power(p, jnp.float32(gamma))
        focal = loss * factor

    out_ref[...] = focal


def _vmem_limit_bytes():
    """Per-chip scoped-VMEM limit (half of physical; safe on v5e/v6e/v7x)."""
    try:
        cap = int(pltpu.get_tpu_info().vmem_capacity_bytes)
    except Exception:
        cap = 64 * 1024 * 1024  # conservative fallback (v7x-sized)
    return min(cap // 2, 100 * 1024 * 1024)


class FocalLoss:
    """JAX/Pallas counterpart of the PyTorch FocalLoss module."""

    def __init__(self, gamma=0.0, alpha=1.0):
        self.gamma = float(gamma)
        self.alpha = float(alpha)  # unused in forward, kept for parity with PyTorch

    def __call__(self, inputs, targets):
        # inputs: (N, C) logits (any float dtype); targets: (N,) integer labels
        n, c = inputs.shape
        logits = jnp.asarray(inputs)                        # keep native dtype
        itemsize = jnp.dtype(logits.dtype).itemsize
        tgt = jnp.asarray(targets).astype(jnp.int32).reshape(n, 1)

        # Sublane alignment by dtype packing: f32 -> 8, bf16/f16 -> 16, int8/fp8 -> 32.
        sub = 8 * max(1, 4 // itemsize)

        vmem_limit = _vmem_limit_bytes()
        # Leave headroom inside the scoped limit for targets/output buffers etc.
        tile_budget = (vmem_limit * 3) // 4

        # Per-row VMEM cost: 2x (double-buffered) native-dtype logits tile plus
        # ~4 live (tile_n, C) f32 temporaries inside the kernel (x, exp(x-m),
        # iota-compare/select product, slack).
        per_row_bytes = c * (2 * itemsize + 16) + 64
        tile_by_vmem = max(sub, (tile_budget // per_row_bytes) // sub * sub)

        if n < sub:
            # Whole (tiny) batch in one full-array block; full-dim block shapes
            # are always legal regardless of (8, 128) alignment.
            tile_n = n
        else:
            n_floor = (n // sub) * sub                      # largest block <= N rows
            tile_n = int(min(n_floor, 8192, tile_by_vmem))
            tile_n = max(sub, (tile_n // sub) * sub)
            # Megacore (v7x, 2 TCs): guarantee >= 2 grid steps when possible.
            if pl.cdiv(n, tile_n) < 2:
                half = pl.cdiv(pl.cdiv(n, 2), sub) * sub
                tile_n = int(max(sub, min(half, n_floor)))

        grid = pl.cdiv(n, tile_n)

        kernel = functools.partial(_focal_loss_kernel, gamma=self.gamma)
        cost = pl.CostEstimate(
            flops=6 * n * c + 12 * n,
            transcendentals=n * c + 2 * n,
            bytes_accessed=n * c * itemsize + n * 4 + n * 4,
        )

        out = pl.pallas_call(
            kernel,
            out_shape=jax.ShapeDtypeStruct((n, 1), jnp.float32),
            grid=(grid,),
            in_specs=[
                pl.BlockSpec((tile_n, c), lambda i: (i, 0)),
                pl.BlockSpec((tile_n, 1), lambda i: (i, 0)),
            ],
            out_specs=pl.BlockSpec((tile_n, 1), lambda i: (i, 0)),
            compiler_params=pltpu.CompilerParams(
                dimension_semantics=("parallel",),
                vmem_limit_bytes=int(vmem_limit),
            ),
            cost_estimate=cost,
        )(logits, tgt)
        return out[:, 0]


def _reference(inputs, targets, gamma):
    # Pure-JAX reference (mirrors nn.CrossEntropyLoss(reduce=False) + focal term)
    logz = jax.nn.logsumexp(inputs, axis=1)
    xt = jnp.take_along_axis(inputs, targets[:, None].astype(jnp.int32), axis=1)[:, 0]
    loss = logz - xt
    if gamma == 0.0:
        return loss
    return loss * jnp.power(1.0 - jnp.exp(-loss), gamma)


if __name__ == "__main__":
    key = jax.random.PRNGKey(0)
    k1, k2, k3, k4, k5, k6 = jax.random.split(key, 6)

    # Test 1: f32 logits, gamma=2 (integer fast path), aligned batch, single block.
    N, C = 8, 32
    logits = jax.random.normal(k1, (N, C), dtype=jnp.float32)
    targets = jax.random.randint(k2, (N,), 0, C, dtype=jnp.int32)
    fl = FocalLoss(gamma=2.0, alpha=1.0)
    out = fl(logits, targets)
    jax.block_until_ready(out)
    ref = _reference(logits, targets, 2.0)
    assert out.shape == (N,)
    assert jnp.allclose(out, ref, atol=1e-5, rtol=1e-5)

    # Test 2: bf16 logits (native-dtype streaming), ragged batch smaller than the
    # sublane packing (full-array block, no padding), gamma=0 (pure CE path).
    N2, C2 = 13, 160
    logits2 = jax.random.normal(k3, (N2, C2), dtype=jnp.bfloat16)
    targets2 = jax.random.randint(k4, (N2,), 0, C2, dtype=jnp.int32)
    fl0 = FocalLoss(gamma=0.0)
    out2 = fl0(logits2, targets2)
    jax.block_until_ready(out2)
    ref2 = _reference(logits2.astype(jnp.float32), targets2, 0.0)
    assert out2.shape == (N2,)
    assert jnp.allclose(out2, ref2, atol=1e-3, rtol=1e-3)

    # Test 3: ragged batch that exercises the multi-step grid (>=2 blocks for
    # megacore) and the unpadded partial last block; non-integer gamma path.
    N3, C3 = 20, 32
    logits3 = jax.random.normal(k5, (N3, C3), dtype=jnp.float32)
    targets3 = jax.random.randint(k6, (N3,), 0, C3, dtype=jnp.int32)
    fl3 = FocalLoss(gamma=2.5)
    out3 = fl3(logits3, targets3)
    jax.block_until_ready(out3)
    ref3 = _reference(logits3, targets3, 2.5)
    assert out3.shape == (N3,)
    assert jnp.allclose(out3, ref3, atol=1e-5, rtol=1e-5)

    print("KERNEL_OK")
</pallas_src>

<mosaic_0001>
module attributes {stable_mosaic.version = 11 : i64} {
  func.func @_focal_loss_kernel(%arg0: i32, %arg1: memref<8x32xf32, #tpu.memory_space<vmem>>, %arg2: memref<8x1xi32, #tpu.memory_space<vmem>>, %arg3: memref<8x1xf32, #tpu.memory_space<vmem>>) attributes {dimension_semantics = [#tpu.dimension_semantics<parallel>], iteration_bounds = array<i64: 1>, scalar_prefetch = 0 : i64, scratch_operands = 0 : i64, tpu.core_type = #tpu.core_type<tc>, window_params = [{transform_indices = @transform_0, window_bounds = array<i64: 8, 32>}, {transform_indices = @transform_1, window_bounds = array<i64: 8, 1>}, {transform_indices = @transform_2, window_bounds = array<i64: 8, 1>}]} {
    %c0 = arith.constant 0 : index
    %c0_0 = arith.constant 0 : index
    %0 = vector.load %arg1[%c0, %c0_0] : memref<8x32xf32, #tpu.memory_space<vmem>>, vector<8x32xf32>
    %c0_1 = arith.constant 0 : index
    %c0_2 = arith.constant 0 : index
    %1 = vector.load %arg2[%c0_1, %c0_2] : memref<8x1xi32, #tpu.memory_space<vmem>>, vector<8x1xi32>
    %cst = arith.constant dense<0xFF800000> : vector<8xf32>
    %2 = vector.multi_reduction <maximumf>, %0, %cst [1] : vector<8x32xf32> to vector<8xf32>
    %3 = vector.shape_cast %2 : vector<8xf32> to vector<8x1xf32>
    %4 = vector.broadcast %3 : vector<8x1xf32> to vector<8x32xf32>
    %5 = arith.subf %0, %4 : vector<8x32xf32>
    %6 = math.exp %5 : vector<8x32xf32>
    %cst_3 = arith.constant dense<0.000000e+00> : vector<8xf32>
    %7 = vector.multi_reduction <add>, %6, %cst_3 [1] : vector<8x32xf32> to vector<8xf32>
    %8 = vector.shape_cast %7 : vector<8xf32> to vector<8x1xf32>
    %9 = math.log %8 : vector<8x1xf32>
    %10 = arith.addf %3, %9 : vector<8x1xf32>
    %11 = tpu.iota {dimensions = array<i32: 1>} : vector<8x32xi32>
    %12 = vector.broadcast %1 : vector<8x1xi32> to vector<8x32xi32>
    %13 = arith.cmpi eq, %11, %12 : vector<8x32xi32>
    %cst_4 = arith.constant 0.000000e+00 : f32
    %14 = vector.broadcast %cst_4 : f32 to vector<8x32xf32>
    %15 = arith.select %13, %0, %14 : vector<8x32xi1>, vector<8x32xf32>
    %cst_5 = arith.constant dense<0.000000e+00> : vector<8xf32>
    %16 = vector.multi_reduction <add>, %15, %cst_5 [1] : vector<8x32xf32> to vector<8xf32>
    %17 = vector.shape_cast %16 : vector<8xf32> to vector<8x1xf32>
    %18 = arith.subf %10, %17 : vector<8x1xf32>
    %cst_6 = arith.constant 0.000000e+00 : f32
    %19 = vector.broadcast %cst_6 : f32 to vector<8x1xf32>
    %20 = arith.subf %19, %18 : vector<8x1xf32>
    %21 = math.exp %20 : vector<8x1xf32>
    %cst_7 = arith.constant 1.000000e+00 : f32
    %22 = vector.broadcast %cst_7 : f32 to vector<8x1xf32>
    %23 = arith.subf %22, %21 : vector<8x1xf32>
    %cst_8 = arith.constant 5.000000e-01 : f32
    %24 = vector.broadcast %cst_8 : f32 to vector<8x1xf32>
    %25 = arith.mulf %24, %18 : vector<8x1xf32>
    %cst_9 = arith.constant 1.000000e+00 : f32
    %26 = vector.broadcast %cst_9 : f32 to vector<8x1xf32>
    %27 = arith.subf %26, %25 : vector<8x1xf32>
    %28 = arith.mulf %18, %27 : vector<8x1xf32>
    %cst_10 = arith.constant 1.000000e-03 : f32
    %29 = vector.broadcast %cst_10 : f32 to vector<8x1xf32>
    %30 = arith.cmpf olt, %18, %29 : vector<8x1xf32>
    %31 = arith.select %30, %28, %23 : vector<8x1xi1>, vector<8x1xf32>
    %cst_11 = arith.constant 0.000000e+00 : f32
    %32 = vector.broadcast %cst_11 : f32 to vector<8x1xf32>
    %33 = arith.maximumf %31, %32 : vector<8x1xf32>
    %34 = arith.mulf %33, %33 : vector<8x1xf32>
    %35 = arith.mulf %18, %34 : vector<8x1xf32>
    %c0_12 = arith.constant 0 : index
    %c0_13 = arith.constant 0 : index
    %36 = vector.load %arg3[%c0_12, %c0_13] : memref<8x1xf32, #tpu.memory_space<vmem>>, vector<8x1xf32>
    tpu.vector_store %arg3[%c0_12, %c0_13], %35 {strides = array<i32>} : memref<8x1xf32, #tpu.memory_space<vmem>>, vector<8x1xf32>,
    return
  }
  func.func @transform_0(%arg0: i32) -> (i32, i32) {
    %c0_i32 = arith.constant 0 : i32
    %c0_i32_0 = arith.constant 0 : i32
    return %arg0, %c0_i32 : i32, i32
  }
  func.func @transform_1(%arg0: i32) -> (i32, i32) {
    %c0_i32 = arith.constant 0 : i32
    %c0_i32_0 = arith.constant 0 : i32
    return %arg0, %c0_i32 : i32, i32
  }
  func.func @transform_2(%arg0: i32) -> (i32, i32) {
    %c0_i32 = arith.constant 0 : i32
    %c0_i32_0 = arith.constant 0 : i32
    return %arg0, %c0_i32 : i32, i32
  }
}

</mosaic_0001>

<llo_original>
// kernel: tpu_custom_call.1
$region0: #{tpu_custom_call.1}
  #allocation0 [shape = 'u32[]', space=smem, size = 0x4, offset = 0x4, fixed_abs, tag = 'smem constant byte address 0x4 - core index']
  #allocation1 [shape = 'u32[144,128]{1,0:T(1,128)}', space=vmem, size = 0x12000, scoped, tag = 'internal scratch']
  %s0 = inlined_call_operand.vmem [shape: f32[8,32], index: 0, kind: input, shape index: {}]
  %s1 = inlined_call_operand.vmem [shape: s32[8,1], index: 1, kind: input, shape index: {}]
  %s2 = inlined_call_operand.vmem [shape: f32[8,1], index: 2, kind: output, shape index: {}]
  %s3 = sld [smem:[#allocation0]]
  $region18: #{tpu_custom_call.1} parent=0
    _
  %s5 = ssub.s32 1, %s3
  %s6 = scalar_select 0, %s5, %s3
  // Predicated region
  $region2: #{tpu_custom_call.1} parent=0 // pred_check
    _
  $region3: #{tpu_custom_call.1} parent=0 // pred_check_branch
    %8 = sbr.rel (0) target = $region5
  $region4: #{tpu_custom_call.1} parent=0 // pred_region
    _
  $region5: #{tpu_custom_call.1} parent=0 // pred_fallthru
    _
  // Predicated region
  $region6: #{tpu_custom_call.1} parent=0 // pred_check
    _
  $region7: #{tpu_custom_call.1} parent=0 // pred_check_branch
    %10 = sbr.rel (0) target = $region9
  $region8: #{tpu_custom_call.1} parent=0 // pred_region
    _
  $region9: #{tpu_custom_call.1} parent=0 // pred_fallthru
    _
  %v11 = vld [vmem:[%s0] sm:$0xff]
  %v12 = vld [vmem:[%s1] sm:$0xff]
  %vm13 = vcmask 261120
  %v14 = vsel %vm13, %v11, -inf
  %15 = vmax.xlane.f32.xlu0 %v14
  %v16 = vpop.xlane.xlu0 %15
  %v17 = vsub.f32 %v11, %v16
  %v18 = vmul.f32 %v17, 1.442695
  %v19 = vpow.pop %v18
  %v20 = vsel %vm13, %v19, 0.0
  %21 = vadd.xlane.f32.xlu0 %v20
  %v22 = vpop.xlane.xlu0 %21
  %v23 = vlog2.pop %v22
  %v24 = vmul.f32 %v23, 0.6931472
  %v25 = vadd.f32 %v16, %v24
  %v26 = vlaneseq
  %v27 = vand.u32 %v26, 127
  %28 = vset.pattern.permute.xlu0 0
  %29 = vperm.xlu0 %28, %v12
  %v30 = vpop.permute.xlu0 %29
  %vm31 = vcmp.eq.s32.totalorder %v27, %v30
  %v32 = vsel %vm31, %v11, 0.0
  %v33 = vsel %vm13, %v32, 0.0
  %34 = vadd.xlane.f32.xlu0 %v33
  %v35 = vpop.xlane.xlu0 %34
  %v36 = vsub.f32 %v25, %v35
  %v37 = vsub.f32 0.0, %v36
  %v38 = vmul.f32 %v37, 1.442695
  %v39 = vpow.pop %v38
  %v40 = vsub.f32 1.0, %v39
  %v41 = vmul.f32 %v36, 0.5
  %v42 = vsub.f32 1.0, %v41
  %v43 = vmul.f32 %v36, %v42
  %vm44 = vcmp.lt.f32.partialorder %v36, 0.001
  %v45 = vsel %vm44, %v43, %v40
  %v46 = vmax.f32 %v45, 0.0
  %v47 = vmul.f32 %v46, %v46
  %v48 = vmul.f32 %v36, %v47
  %vm49 = vcmask 7168
  %50 = vst.msk [vmem:[%s2] sm:$0xff] %vm49, %v48
  // Predicated region
  $region10: #{tpu_custom_call.1} parent=0 // pred_check
    _
  $region11: #{tpu_custom_call.1} parent=0 // pred_check_branch
    %52 = sbr.rel (0) target = $region13
  $region12: #{tpu_custom_call.1} parent=0 // pred_region
    _
  $region13: #{tpu_custom_call.1} parent=0 // pred_fallthru
    _
  // Predicated region
  $region14: #{tpu_custom_call.1} parent=0 // pred_check
    _
  $region15: #{tpu_custom_call.1} parent=0 // pred_check_branch
    %54 = sbr.rel (0) target = $region17
  $region16: #{tpu_custom_call.1} parent=0 // pred_region
    _
  $region17: #{tpu_custom_call.1} parent=0 // pred_fallthru
    _

</llo_original>
